<compile_context>
chip_gen: v5e
topology: v5e:2x2
jax: 0.10.0
libtpu: 0.0.40
codegen_flags: <defaults>
</compile_context>

<pallas_src>
import functools
import re

import jax
import jax.numpy as jnp
from jax import lax
from jax.experimental import pallas as pl
from jax.experimental.pallas import tpu as pltpu


def _round_up(x, m):
    return ((x + m - 1) // m) * m


def _tpu_generation():
    """Best-effort TPU generation (4/5/6/7/...) from the device kind string."""
    try:
        kind = jax.devices()[0].device_kind.lower()
    except Exception:
        return None
    m = re.search(r"v(\d+)", kind)
    return int(m.group(1)) if m else None


# Per-generation (tm, tn, tk) defaults and scoped-VMEM limits.
_GEN_TILES = {
    5: (512, 512, 1024),   # v5e: grow tk first (amortize per-step overhead, low HBM BW)
    6: (1024, 1024, 512),  # v6e: big output tile (128 MiB physical VMEM)
    7: (512, 512, 1024),   # v7x: 64 MiB VMEM per TC -> keep the budget modest
}
_GEN_VMEM_LIMIT = {5: 64 << 20, 6: 64 << 20, 7: 48 << 20}
_DEFAULT_TILES = (512, 512, 512)


def _small_kernel(x_ref, w_ref, b_ref, o_ref, *, precision):
    # Whole problem resident in VMEM: one matmul + bias, no pipelining needed.
    acc = jnp.dot(x_ref[...], w_ref[...],
                  preferred_element_type=jnp.float32, precision=precision)
    o_ref[...] = (acc + b_ref[...]).astype(o_ref.dtype)


def _tiled_kernel(x_ref, w_ref, b_ref, o_ref, acc_ref, *, k_rem, precision):
    # Grid: (M//tm, N//tn, K//tk); reduction axis (k) last. The f32 scratch
    # accumulator stays VMEM-resident across k for the current (i, j) tile.
    k = pl.program_id(2)
    nk = pl.num_programs(2)

    x = x_ref[...]
    w = w_ref[...]
    if k_rem:
        # K does not divide tk: the last K block carries unspecified padding
        # (could be NaN), so zero the tail of BOTH operands in-kernel (cheap
        # VPU selects; all other tails only feed discarded output elements).
        tk = x.shape[-1]
        valid = jnp.where(k == nk - 1, k_rem, tk)
        x = jnp.where(lax.broadcasted_iota(jnp.int32, x.shape, 1) < valid, x, 0)
        w = jnp.where(lax.broadcasted_iota(jnp.int32, w.shape, 0) < valid, w, 0)

    prod = jnp.dot(x, w, preferred_element_type=jnp.float32, precision=precision)

    @pl.when(k == 0)
    def _():
        # Bias fused into the init: no zero-fill, no final bias epilogue.
        acc_ref[...] = prod + b_ref[...]

    @pl.when(k != 0)
    def _():
        acc_ref[...] += prod

    @pl.when(k == nk - 1)
    def _():
        o_ref[...] = acc_ref[...].astype(o_ref.dtype)


def _select_tiles(M, N, K, tm, tn, tk, gen):
    # Clamp to hardware-aligned problem dims so small problems don't over-pad;
    # keep tm a multiple of 8 and tn/tk multiples of 128 (the (8,128) rule).
    tm = max(8, min(tm, _round_up(M, 8)))
    tn = max(128, min(tn, _round_up(N, 128)))
    tk = max(128, min(tk, _round_up(K, 128)))
    if gen is not None and gen >= 7:
        # v7x: 2 TensorCores are sharded over the parallel (i, j) grid axes;
        # make sure both get work when the problem allows it.
        if pl.cdiv(M, tm) * pl.cdiv(N, tn) < 2:
            if M > 8:
                tm = _round_up(pl.cdiv(M, 2), 8)
            elif N > 128:
                tn = _round_up(pl.cdiv(N, 2), 128)
    return tm, tn, tk


def sparse_input_linear(
    x,
    weight,
    bias,
    *,
    compute_dtype=jnp.bfloat16,   # bf16 -> full-rate MXU; float32 -> HIGHEST precision
    out_dtype=jnp.float32,
    tm=None,
    tn=None,
    tk=None,
    force_tiled=False,
    fast_path_bytes=12 * 1024 * 1024,
):
    """Forward pass of SparseInputLinear: y = x @ weight + bias."""
    M, K = x.shape
    K2, N = weight.shape
    assert K == K2 and bias.shape == (N,)

    compute_dtype = jnp.dtype(compute_dtype)
    # Explicit precision: bf16 operands run the MXU at full rate; keeping f32
    # operands deliberately pays the multi-pass cost via Precision.HIGHEST.
    precision = (lax.Precision.HIGHEST if compute_dtype == jnp.float32
                 else lax.Precision.DEFAULT)

    if x.dtype != compute_dtype:
        x = x.astype(compute_dtype)
    if weight.dtype != compute_dtype:
        weight = weight.astype(compute_dtype)
    bias2d = bias.astype(jnp.float32).reshape(1, N)   # bias stays f32 (tiny)

    in_bytes = compute_dtype.itemsize
    out_bytes = jnp.dtype(out_dtype).itemsize
    total_bytes = in_bytes * (M * K + K * N) + 4 * N + out_bytes * M * N
    cost = pl.CostEstimate(
        flops=2 * M * N * K, transcendentals=0, bytes_accessed=total_bytes
    )

    gen = _tpu_generation()

    if not force_tiled and total_bytes <= fast_path_bytes:
        # ---- Fast path: whole operands VMEM-resident, single invocation,
        # no grid -> zero per-grid-step overhead. ----
        return pl.pallas_call(
            functools.partial(_small_kernel, precision=precision),
            out_shape=jax.ShapeDtypeStruct((M, N), out_dtype),
            in_specs=[
                pl.BlockSpec(memory_space=pltpu.MemorySpace.VMEM),
                pl.BlockSpec(memory_space=pltpu.MemorySpace.VMEM),
                pl.BlockSpec(memory_space=pltpu.MemorySpace.VMEM),
            ],
            out_specs=pl.BlockSpec(memory_space=pltpu.MemorySpace.VMEM),
            cost_estimate=cost,
        )(x, weight, bias2d)

    # ---- Tiled path (no wrapper-side padding or output slicing). ----
    dtm, dtn, dtk = _GEN_TILES.get(gen, _DEFAULT_TILES)
    tm, tn, tk = _select_tiles(
        M, N, K,
        tm if tm is not None else dtm,
        tn if tn is not None else dtn,
        tk if tk is not None else dtk,
        gen,
    )
    grid = (pl.cdiv(M, tm), pl.cdiv(N, tn), pl.cdiv(K, tk))
    k_rem = K % tk   # static; nonzero => in-kernel K-tail mask

    return pl.pallas_call(
        functools.partial(_tiled_kernel, k_rem=k_rem, precision=precision),
        out_shape=jax.ShapeDtypeStruct((M, N), out_dtype),
        grid_spec=pltpu.PrefetchScalarGridSpec(
            num_scalar_prefetch=0,
            grid=grid,
            in_specs=[
                pl.BlockSpec((tm, tk), lambda i, j, k: (i, k)),  # x tile
                pl.BlockSpec((tk, tn), lambda i, j, k: (k, j)),  # W tile
                pl.BlockSpec((1, tn), lambda i, j, k: (0, j)),   # bias tile (f32)
            ],
            out_specs=pl.BlockSpec((tm, tn), lambda i, j, k: (i, j)),
            scratch_shapes=[pltpu.VMEM((tm, tn), jnp.float32)],
        ),
        compiler_params=pltpu.CompilerParams(
            dimension_semantics=("parallel", "parallel", "arbitrary"),
            vmem_limit_bytes=_GEN_VMEM_LIMIT.get(gen),
        ),
        cost_estimate=cost,
    )(x, weight, bias2d)


if __name__ == "__main__":
    key = jax.random.PRNGKey(0)
    kx, kw, kb, kx2, kw2, kb2 = jax.random.split(key, 6)

    # --- Test 1: module-sized demo (inp_dim=256, out_dim=128, 8 rows), exact
    # f32 mode (compute_dtype=f32 -> Precision.HIGHEST), fast path. Parameter
    # init mirrors reset_parameters(): uniform(-stdv, stdv), stdv=1/sqrt(out_dim).
    inp_dim, out_dim, n_rows = 256, 128, 8
    stdv = 1.0 / jnp.sqrt(jnp.float32(out_dim))
    weight = jax.random.uniform(
        kw, (inp_dim, out_dim), jnp.float32, minval=-stdv, maxval=stdv
    )
    bias = jax.random.uniform(
        kb, (out_dim,), jnp.float32, minval=-stdv, maxval=stdv
    )
    x = jax.random.normal(kx, (n_rows, inp_dim), jnp.float32)

    y = jax.block_until_ready(
        sparse_input_linear(x, weight, bias, compute_dtype=jnp.float32)
    )
    y_ref = jnp.dot(x, weight, precision=lax.Precision.HIGHEST) + bias
    assert y.shape == (n_rows, out_dim)
    assert jnp.allclose(y, y_ref, atol=1e-5, rtol=1e-5)

    # --- Test 2: tiled path with bf16 MXU operands, non-tile-multiple dims:
    # exercises the in-kernel K-tail mask (384 % 256 != 0) and the discarded
    # M/N tail blocks, with no wrapper-side pad/slice. ---
    M2, K2, N2 = 272, 384, 200
    w2 = jax.random.uniform(kw2, (K2, N2), jnp.float32, minval=-0.1, maxval=0.1)
    b2 = jax.random.uniform(kb2, (N2,), jnp.float32, minval=-0.1, maxval=0.1)
    x2 = jax.random.normal(kx2, (M2, K2), jnp.float32)

    y2 = jax.block_until_ready(
        sparse_input_linear(x2, w2, b2, tm=64, tn=128, tk=256, force_tiled=True)
    )
    y2_ref = jnp.dot(x2, w2, precision=lax.Precision.HIGHEST) + b2
    assert y2.shape == (M2, N2)
    # bf16 operands (f32 accumulation) -> loose tolerance vs. the f32 reference.
    assert jnp.allclose(y2, y2_ref, atol=6e-2, rtol=5e-2)

    print("KERNEL_OK")
</pallas_src>

<mosaic_0001>
module attributes {stable_mosaic.version = 11 : i64} {
  func.func @_small_kernel(%arg0: memref<8x256xf32, #tpu.memory_space<vmem>>, %arg1: memref<256x128xf32, #tpu.memory_space<vmem>>, %arg2: memref<1x128xf32, #tpu.memory_space<vmem>>, %arg3: memref<8x128xf32, #tpu.memory_space<vmem>>) attributes {dimension_semantics = [], scalar_prefetch = 0 : i64, scratch_operands = 0 : i64, tpu.core_type = #tpu.core_type<tc>} {
    %c0 = arith.constant 0 : index
    %c0_0 = arith.constant 0 : index
    %0 = vector.load %arg0[%c0, %c0_0] : memref<8x256xf32, #tpu.memory_space<vmem>>, vector<8x256xf32>
    %c0_1 = arith.constant 0 : index
    %c0_2 = arith.constant 0 : index
    %1 = vector.load %arg1[%c0_1, %c0_2] : memref<256x128xf32, #tpu.memory_space<vmem>>, vector<256x128xf32>
    %cst = arith.constant dense<0.000000e+00> : vector<8x128xf32>
    %2 = tpu.matmul %0, %1, %cst {dimension_numbers = #tpu.dot_dimension_numbers<[1], [0], [0], [1], [0, 0, 1, 1], [], []>, precision = #tpu.contract_precision<fp32>} : vector<8x256xf32>, vector<256x128xf32>, vector<8x128xf32> -> vector<8x128xf32>
    %c0_3 = arith.constant 0 : index
    %c0_4 = arith.constant 0 : index
    %3 = vector.load %arg2[%c0_3, %c0_4] : memref<1x128xf32, #tpu.memory_space<vmem>>, vector<1x128xf32>
    %4 = vector.broadcast %3 : vector<1x128xf32> to vector<8x128xf32>
    %5 = arith.addf %2, %4 : vector<8x128xf32>
    %c0_5 = arith.constant 0 : index
    %c0_6 = arith.constant 0 : index
    %6 = vector.load %arg3[%c0_5, %c0_6] : memref<8x128xf32, #tpu.memory_space<vmem>>, vector<8x128xf32>
    tpu.vector_store %arg3[%c0_5, %c0_6], %5 {strides = array<i32>} : memref<8x128xf32, #tpu.memory_space<vmem>>, vector<8x128xf32>,
    return
  }
}

</mosaic_0001>

<llo_original>
// kernel: tpu_custom_call.1
$region0: #{tpu_custom_call.1}
  #allocation0 [shape = 'u32[]', space=smem, size = 0x4, offset = 0x4, fixed_abs, tag = 'smem constant byte address 0x4 - core index']
  #allocation1 [shape = 'u32[72,128]{1,0:T(1,128)}', space=vmem, size = 0x9000, scoped, tag = 'internal scratch']
  %s0 = inlined_call_operand.hbm [shape: f32[8,256], index: 0, kind: input, shape index: {}]
  %s1 = inlined_call_operand.hbm [shape: f32[256,128], index: 1, kind: input, shape index: {}]
  %s2 = inlined_call_operand.vmem [shape: f32[1,128], index: 2, kind: input, shape index: {}]
  %s3 = inlined_call_operand.hbm [shape: f32[8,128], index: 3, kind: output, shape index: {}]
  %s4 = sld [smem:[#allocation0]]
  $region30: #{tpu_custom_call.1} parent=0
    _
  %s6 = ssub.s32 1, %s4
  %s7 = scalar_select 0, %s6, %s4
  $region1: #{tpu_custom_call.1} parent=0
    #allocation2 [shape = 'u8[8192]{0}', space=vmem, size = 0x2000, scoped, tag = 'input window, operand 0, single buffered']
    #allocation3 [shape = 's32[1]{0}', space=sflag, size = 0x4, scoped, tag = 'scoped memory for tpu_custom_call.1']
    #allocation4 [shape = 's32[1]{0}', space=sflag, size = 0x4, scoped, tag = 'scoped memory for tpu_custom_call.1']
    #allocation5 [shape = 'u8[131072]{0}', space=vmem, size = 0x20000, scoped, tag = 'input window, operand 1, single buffered']
    #allocation6 [shape = 's32[1]{0}', space=sflag, size = 0x4, scoped, tag = 'scoped memory for tpu_custom_call.1']
    #allocation7 [shape = 'u8[4096]{0}', space=vmem, size = 0x1000, scoped, tag = 'output window, operand 0, single buffered']
    %8 = vsyncpa [#allocation3], 0
    %9 = vsyncpa [#allocation6], 0
    %10 = vsyncpa [#allocation4], 0
    // Predicated region
    $region2: #{tpu_custom_call.1} parent=1 // pred_check
      _
    $region3: #{tpu_custom_call.1} parent=1 // pred_check_branch
      %12 = sbr.rel (0) target = $region5
    $region4: #{tpu_custom_call.1} parent=1 // pred_region
      %14 = vsyncadd [#allocation3], 0
      %s16 = sshll.u32 %s0, 4
      %s17 = int_to_ptr.hbm [resolvable:$true] %s16
      %s18 = sshll.u32 [#allocation2], 4
      %s19 = int_to_ptr.vmem [resolvable:$true] %s18
      %21 = dma.hbm_to_vmem [thread:$0]  %s17, 256, %s19, [#allocation3]
    $region5: #{tpu_custom_call.1} parent=1 // pred_fallthru
      _
    // Predicated region
    $region6: #{tpu_custom_call.1} parent=1 // pred_check
      _
    $region7: #{tpu_custom_call.1} parent=1 // pred_check_branch
      %23 = sbr.rel (0) target = $region9
    $region8: #{tpu_custom_call.1} parent=1 // pred_region
      %25 = vsyncadd [#allocation6], 0
      %s26 = sshll.u32 %s1, 4
      %s27 = int_to_ptr.hbm [resolvable:$true] %s26
      %s28 = sshll.u32 [#allocation5], 4
      %s29 = int_to_ptr.vmem [resolvable:$true] %s28
      %34 = dma.hbm_to_vmem [thread:$0]  %s27, 4096, %s29, [#allocation6], 128, 128, 8
    $region9: #{tpu_custom_call.1} parent=1 // pred_fallthru
      _
    // Predicated region
    $region10: #{tpu_custom_call.1} parent=1 // pred_check
      _
    $region11: #{tpu_custom_call.1} parent=1 // pred_check_branch
      %36 = sbr.rel (0) target = $region13
    $region12: #{tpu_custom_call.1} parent=1 // pred_region
      _
    $region13: #{tpu_custom_call.1} parent=1 // pred_fallthru
      _
    // Predicated region
    $region14: #{tpu_custom_call.1} parent=1 // pred_check
      _
    $region15: #{tpu_custom_call.1} parent=1 // pred_check_branch
      %38 = sbr.rel (0) target = $region17
    $region16: #{tpu_custom_call.1} parent=1 // pred_region
      %40 = dma.done [#allocation3], 256
    $region17: #{tpu_custom_call.1} parent=1 // pred_fallthru
      _
    // Predicated region
    $region18: #{tpu_custom_call.1} parent=1 // pred_check
      _
    $region19: #{tpu_custom_call.1} parent=1 // pred_check_branch
      %42 = sbr.rel (0) target = $region21
    $region20: #{tpu_custom_call.1} parent=1 // pred_region
      %44 = dma.done [#allocation6], 4096
    $region21: #{tpu_custom_call.1} parent=1 // pred_fallthru
      _
    %v45 = vld [vmem:[#allocation2] sm:$0xff]
    %v46 = vld [vmem:[#allocation2 + $0x8] sm:$0xff]
    %v47 = vld [vmem:[#allocation5] sm:$0xff]
    %v48 = vld [vmem:[#allocation5 + $0x8] sm:$0xff]
    %v49 = vld [vmem:[#allocation5 + $0x10] sm:$0xff]
    %v50 = vld [vmem:[#allocation5 + $0x18] sm:$0xff]
    %v51 = vld [vmem:[#allocation5 + $0x20] sm:$0xff]
    %v52 = vld [vmem:[#allocation5 + $0x28] sm:$0xff]
    %v53 = vld [vmem:[#allocation5 + $0x30] sm:$0xff]
    %v54 = vld [vmem:[#allocation5 + $0x38] sm:$0xff]
    %v55 = vld [vmem:[#allocation5 + $0x40] sm:$0xff]
    %v56 = vld [vmem:[#allocation5 + $0x48] sm:$0xff]
    %v57 = vld [vmem:[#allocation5 + $0x50] sm:$0xff]
    %v58 = vld [vmem:[#allocation5 + $0x58] sm:$0xff]
    %v59 = vld [vmem:[#allocation5 + $0x60] sm:$0xff]
    %v60 = vld [vmem:[#allocation5 + $0x68] sm:$0xff]
    %v61 = vld [vmem:[#allocation5 + $0x70] sm:$0xff]
    %v62 = vld [vmem:[#allocation5 + $0x78] sm:$0xff]
    %v63 = vld [vmem:[#allocation5 + $0x80] sm:$0xff]
    %v64 = vld [vmem:[#allocation5 + $0x88] sm:$0xff]
    %v65 = vld [vmem:[#allocation5 + $0x90] sm:$0xff]
    %v66 = vld [vmem:[#allocation5 + $0x98] sm:$0xff]
    %v67 = vld [vmem:[#allocation5 + $0xa0] sm:$0xff]
    %v68 = vld [vmem:[#allocation5 + $0xa8] sm:$0xff]
    %v69 = vld [vmem:[#allocation5 + $0xb0] sm:$0xff]
    %v70 = vld [vmem:[#allocation5 + $0xb8] sm:$0xff]
    %v71 = vld [vmem:[#allocation5 + $0xc0] sm:$0xff]
    %v72 = vld [vmem:[#allocation5 + $0xc8] sm:$0xff]
    %v73 = vld [vmem:[#allocation5 + $0xd0] sm:$0xff]
    %v74 = vld [vmem:[#allocation5 + $0xd8] sm:$0xff]
    %v75 = vld [vmem:[#allocation5 + $0xe0] sm:$0xff]
    %v76 = vld [vmem:[#allocation5 + $0xe8] sm:$0xff]
    %v77 = vld [vmem:[#allocation5 + $0xf0] sm:$0xff]
    %v78 = vld [vmem:[#allocation5 + $0xf8] sm:$0xff]
    %v79 = vld [vmem:[%s2] sm:$0x1]
    %v81 = vperm.slane %v79, 0
    %v83 = vand.u32 %v62, 4294901760
    %84 = vmatpush.msra.mxu0 %v83
    %v85 = vand.u32 %v61, 4294901760
    %86 = vmatpush.msra.mxu0 %v85
    %v87 = vand.u32 %v60, 4294901760
    %88 = vmatpush.msra.mxu0 %v87
    %v89 = vand.u32 %v59, 4294901760
    %90 = vmatpush.msra.mxu0 %v89
    %v91 = vand.u32 %v58, 4294901760
    %92 = vmatpush.msra.mxu0 %v91
    %v93 = vand.u32 %v57, 4294901760
    %94 = vmatpush.msra.mxu0 %v93
    %v95 = vand.u32 %v56, 4294901760
    %96 = vmatpush.msra.mxu0 %v95
    %v97 = vand.u32 %v55, 4294901760
    %98 = vmatpush.msra.mxu0 %v97
    %v99 = vand.u32 %v54, 4294901760
    %100 = vmatpush.msra.mxu0 %v99
    %v101 = vand.u32 %v53, 4294901760
    %102 = vmatpush.msra.mxu0 %v101
    %v103 = vand.u32 %v52, 4294901760
    %104 = vmatpush.msra.mxu0 %v103
    %v105 = vand.u32 %v51, 4294901760
    %106 = vmatpush.msra.mxu0 %v105
    %v107 = vand.u32 %v50, 4294901760
    %108 = vmatpush.msra.mxu0 %v107
    %v109 = vand.u32 %v49, 4294901760
    %110 = vmatpush.msra.mxu0 %v109
    %v111 = vand.u32 %v48, 4294901760
    %112 = vmatpush.msra.mxu0 %v111
    %v113 = vand.u32 %v47, 4294901760
    %114 = vmatpush.msra.mxu0 %v113
    %v115 = vand.u32 %v45, 4294901760
    %v116 = vsub.f32 %v45, %v115
    %v117 = vand.u32 %v116, 4294901760
    %v118 = vsub.f32 %v116, %v117
    %v119 = vand.u32 %v118, 4294901760
    %120 = vmatmul.f32.gmra.mxu0 %v119
    %v121 = vpop.f32.mrf.mxu0
    %v122 = vadd.f32 %v81, %v121
    %123 = vdwg.mxu0
    %v124 = vand.u32 %v62, 4294901760
    %v125 = vsub.f32 %v62, %v124
    %v126 = vand.u32 %v125, 4294901760
    %v127 = vsub.f32 %v125, %v126
    %v128 = vand.u32 %v127, 4294901760
    %129 = vmatpush.msra.mxu0 %v128
    %v130 = vand.u32 %v61, 4294901760
    %v131 = vsub.f32 %v61, %v130
    %v132 = vand.u32 %v131, 4294901760
    %v133 = vsub.f32 %v131, %v132
    %v134 = vand.u32 %v133, 4294901760
    %135 = vmatpush.msra.mxu0 %v134
    %v136 = vand.u32 %v60, 4294901760
    %v137 = vsub.f32 %v60, %v136
    %v138 = vand.u32 %v137, 4294901760
    %v139 = vsub.f32 %v137, %v138
    %v140 = vand.u32 %v139, 4294901760
    %141 = vmatpush.msra.mxu0 %v140
    %v142 = vand.u32 %v59, 4294901760
    %v143 = vsub.f32 %v59, %v142
    %v144 = vand.u32 %v143, 4294901760
    %v145 = vsub.f32 %v143, %v144
    %v146 = vand.u32 %v145, 4294901760
    %147 = vmatpush.msra.mxu0 %v146
    %v148 = vand.u32 %v58, 4294901760
    %v149 = vsub.f32 %v58, %v148
    %v150 = vand.u32 %v149, 4294901760
    %v151 = vsub.f32 %v149, %v150
    %v152 = vand.u32 %v151, 4294901760
    %153 = vmatpush.msra.mxu0 %v152
    %v154 = vand.u32 %v57, 4294901760
    %v155 = vsub.f32 %v57, %v154
    %v156 = vand.u32 %v155, 4294901760
    %v157 = vsub.f32 %v155, %v156
    %v158 = vand.u32 %v157, 4294901760
    %159 = vmatpush.msra.mxu0 %v158
    %v160 = vand.u32 %v56, 4294901760
    %v161 = vsub.f32 %v56, %v160
    %v162 = vand.u32 %v161, 4294901760
    %v163 = vsub.f32 %v161, %v162
    %v164 = vand.u32 %v163, 4294901760
    %165 = vmatpush.msra.mxu0 %v164
    %v166 = vand.u32 %v55, 4294901760
    %v167 = vsub.f32 %v55, %v166
    %v168 = vand.u32 %v167, 4294901760
    %v169 = vsub.f32 %v167, %v168
    %v170 = vand.u32 %v169, 4294901760
    %171 = vmatpush.msra.mxu0 %v170
    %v172 = vand.u32 %v54, 4294901760
    %v173 = vsub.f32 %v54, %v172
    %v174 = vand.u32 %v173, 4294901760
    %v175 = vsub.f32 %v173, %v174
    %v176 = vand.u32 %v175, 4294901760
    %177 = vmatpush.msra.mxu0 %v176
    %v178 = vand.u32 %v53, 4294901760
    %v179 = vsub.f32 %v53, %v178
    %v180 = vand.u32 %v179, 4294901760
    %v181 = vsub.f32 %v179, %v180
    %v182 = vand.u32 %v181, 4294901760
    %183 = vmatpush.msra.mxu0 %v182
    %v184 = vand.u32 %v52, 4294901760
    %v185 = vsub.f32 %v52, %v184
    %v186 = vand.u32 %v185, 4294901760
    %v187 = vsub.f32 %v185, %v186
    %v188 = vand.u32 %v187, 4294901760
    %189 = vmatpush.msra.mxu0 %v188
    %v190 = vand.u32 %v51, 4294901760
    %v191 = vsub.f32 %v51, %v190
    %v192 = vand.u32 %v191, 4294901760
    %v193 = vsub.f32 %v191, %v192
    %v194 = vand.u32 %v193, 4294901760
    %195 = vmatpush.msra.mxu0 %v194
    %v196 = vand.u32 %v50, 4294901760
    %v197 = vsub.f32 %v50, %v196
    %v198 = vand.u32 %v197, 4294901760
    %v199 = vsub.f32 %v197, %v198
    %v200 = vand.u32 %v199, 4294901760
    %201 = vmatpush.msra.mxu0 %v200
    %v202 = vand.u32 %v49, 4294901760
    %v203 = vsub.f32 %v49, %v202
    %v204 = vand.u32 %v203, 4294901760
    %v205 = vsub.f32 %v203, %v204
    %v206 = vand.u32 %v205, 4294901760
    %207 = vmatpush.msra.mxu0 %v206
    %v208 = vand.u32 %v48, 4294901760
    %v209 = vsub.f32 %v48, %v208
    %v210 = vand.u32 %v209, 4294901760
    %v211 = vsub.f32 %v209, %v210
    %v212 = vand.u32 %v211, 4294901760
    %213 = vmatpush.msra.mxu0 %v212
    %v214 = vand.u32 %v47, 4294901760
    %v215 = vsub.f32 %v47, %v214
    %v216 = vand.u32 %v215, 4294901760
    %v217 = vsub.f32 %v215, %v216
    %v218 = vand.u32 %v217, 4294901760
    %219 = vmatpush.msra.mxu0 %v218
    %v220 = vand.u32 %v45, 4294901760
    %221 = vmatmul.f32.gmra.mxu0 %v220
    %v222 = vpop.f32.mrf.mxu0
    %v223 = vadd.f32 %v122, %v222
    %224 = vdwg.mxu0
    %v225 = vand.u32 %v62, 4294901760
    %v226 = vsub.f32 %v62, %v225
    %227 = vmatpush.msra.mxu0 %v226
    %v228 = vand.u32 %v61, 4294901760
    %v229 = vsub.f32 %v61, %v228
    %230 = vmatpush.msra.mxu0 %v229
    %v231 = vand.u32 %v60, 4294901760
    %v232 = vsub.f32 %v60, %v231
    %233 = vmatpush.msra.mxu0 %v232
    %v234 = vand.u32 %v59, 4294901760
    %v235 = vsub.f32 %v59, %v234
    %236 = vmatpush.msra.mxu0 %v235
    %v237 = vand.u32 %v58, 4294901760
    %v238 = vsub.f32 %v58, %v237
    %239 = vmatpush.msra.mxu0 %v238
    %v240 = vand.u32 %v57, 4294901760
    %v241 = vsub.f32 %v57, %v240
    %242 = vmatpush.msra.mxu0 %v241
    %v243 = vand.u32 %v56, 4294901760
    %v244 = vsub.f32 %v56, %v243
    %245 = vmatpush.msra.mxu0 %v244
    %v246 = vand.u32 %v55, 4294901760
    %v247 = vsub.f32 %v55, %v246
    %248 = vmatpush.msra.mxu0 %v247
    %v249 = vand.u32 %v54, 4294901760
    %v250 = vsub.f32 %v54, %v249
    %251 = vmatpush.msra.mxu0 %v250
    %v252 = vand.u32 %v53, 4294901760
    %v253 = vsub.f32 %v53, %v252
    %254 = vmatpush.msra.mxu0 %v253
    %v255 = vand.u32 %v52, 4294901760
    %v256 = vsub.f32 %v52, %v255
    %257 = vmatpush.msra.mxu0 %v256
    %v258 = vand.u32 %v51, 4294901760
    %v259 = vsub.f32 %v51, %v258
    %260 = vmatpush.msra.mxu0 %v259
    %v261 = vand.u32 %v50, 4294901760
    %v262 = vsub.f32 %v50, %v261
    %263 = vmatpush.msra.mxu0 %v262
    %v264 = vand.u32 %v49, 4294901760
    %v265 = vsub.f32 %v49, %v264
    %266 = vmatpush.msra.mxu0 %v265
    %v267 = vand.u32 %v48, 4294901760
    %v268 = vsub.f32 %v48, %v267
    %269 = vmatpush.msra.mxu0 %v268
    %v270 = vand.u32 %v47, 4294901760
    %v271 = vsub.f32 %v47, %v270
    %272 = vmatpush.msra.mxu0 %v271
    %v273 = vand.u32 %v45, 4294901760
    %v274 = vsub.f32 %v45, %v273
    %275 = vmatmul.f32.gmra.mxu0 %v274
    %v276 = vpop.f32.mrf.mxu0
    %v277 = vadd.f32 %v223, %v276
    %278 = vdwg.mxu0
    %v279 = vand.u32 %v62, 4294901760
    %280 = vmatpush.msra.mxu0 %v279
    %v281 = vand.u32 %v61, 4294901760
    %282 = vmatpush.msra.mxu0 %v281
    %v283 = vand.u32 %v60, 4294901760
    %284 = vmatpush.msra.mxu0 %v283
    %v285 = vand.u32 %v59, 4294901760
    %286 = vmatpush.msra.mxu0 %v285
    %v287 = vand.u32 %v58, 4294901760
    %288 = vmatpush.msra.mxu0 %v287
    %v289 = vand.u32 %v57, 4294901760
    %290 = vmatpush.msra.mxu0 %v289
    %v291 = vand.u32 %v56, 4294901760
    %292 = vmatpush.msra.mxu0 %v291
    %v293 = vand.u32 %v55, 4294901760
    %294 = vmatpush.msra.mxu0 %v293
    %v295 = vand.u32 %v54, 4294901760
    %296 = vmatpush.msra.mxu0 %v295
    %v297 = vand.u32 %v53, 4294901760
    %298 = vmatpush.msra.mxu0 %v297
    %v299 = vand.u32 %v52, 4294901760
    %300 = vmatpush.msra.mxu0 %v299
    %v301 = vand.u32 %v51, 4294901760
    %302 = vmatpush.msra.mxu0 %v301
    %v303 = vand.u32 %v50, 4294901760
    %304 = vmatpush.msra.mxu0 %v303
    %v305 = vand.u32 %v49, 4294901760
    %306 = vmatpush.msra.mxu0 %v305
    %v307 = vand.u32 %v48, 4294901760
    %308 = vmatpush.msra.mxu0 %v307
    %v309 = vand.u32 %v47, 4294901760
    %310 = vmatpush.msra.mxu0 %v309
    %v311 = vand.u32 %v45, 4294901760
    %v312 = vsub.f32 %v45, %v311
    %v313 = vand.u32 %v312, 4294901760
    %314 = vmatmul.f32.gmra.mxu0 %v313
    %v315 = vpop.f32.mrf.mxu0
    %v316 = vadd.f32 %v277, %v315
    %317 = vdwg.mxu0
    %v318 = vand.u32 %v62, 4294901760
    %v319 = vsub.f32 %v62, %v318
    %v320 = vand.u32 %v319, 4294901760
    %321 = vmatpush.msra.mxu0 %v320
    %v322 = vand.u32 %v61, 4294901760
    %v323 = vsub.f32 %v61, %v322
    %v324 = vand.u32 %v323, 4294901760
    %325 = vmatpush.msra.mxu0 %v324
    %v326 = vand.u32 %v60, 4294901760
    %v327 = vsub.f32 %v60, %v326
    %v328 = vand.u32 %v327, 4294901760
    %329 = vmatpush.msra.mxu0 %v328
    %v330 = vand.u32 %v59, 4294901760
    %v331 = vsub.f32 %v59, %v330
    %v332 = vand.u32 %v331, 4294901760
    %333 = vmatpush.msra.mxu0 %v332
    %v334 = vand.u32 %v58, 4294901760
    %v335 = vsub.f32 %v58, %v334
    %v336 = vand.u32 %v335, 4294901760
    %337 = vmatpush.msra.mxu0 %v336
    %v338 = vand.u32 %v57, 4294901760
    %v339 = vsub.f32 %v57, %v338
    %v340 = vand.u32 %v339, 4294901760
    %341 = vmatpush.msra.mxu0 %v340
    %v342 = vand.u32 %v56, 4294901760
    %v343 = vsub.f32 %v56, %v342
    %v344 = vand.u32 %v343, 4294901760
    %345 = vmatpush.msra.mxu0 %v344
    %v346 = vand.u32 %v55, 4294901760
    %v347 = vsub.f32 %v55, %v346
    %v348 = vand.u32 %v347, 4294901760
    %349 = vmatpush.msra.mxu0 %v348
    %v350 = vand.u32 %v54, 4294901760
    %v351 = vsub.f32 %v54, %v350
    %v352 = vand.u32 %v351, 4294901760
    %353 = vmatpush.msra.mxu0 %v352
    %v354 = vand.u32 %v53, 4294901760
    %v355 = vsub.f32 %v53, %v354
    %v356 = vand.u32 %v355, 4294901760
    %357 = vmatpush.msra.mxu0 %v356
    %v358 = vand.u32 %v52, 4294901760
    %v359 = vsub.f32 %v52, %v358
    %v360 = vand.u32 %v359, 4294901760
    %361 = vmatpush.msra.mxu0 %v360
    %v362 = vand.u32 %v51, 4294901760
    %v363 = vsub.f32 %v51, %v362
    %v364 = vand.u32 %v363, 4294901760
    %365 = vmatpush.msra.mxu0 %v364
    %v366 = vand.u32 %v50, 4294901760
    %v367 = vsub.f32 %v50, %v366
    %v368 = vand.u32 %v367, 4294901760
    %369 = vmatpush.msra.mxu0 %v368
    %v370 = vand.u32 %v49, 4294901760
    %v371 = vsub.f32 %v49, %v370
    %v372 = vand.u32 %v371, 4294901760
    %373 = vmatpush.msra.mxu0 %v372
    %v374 = vand.u32 %v48, 4294901760
    %v375 = vsub.f32 %v48, %v374
    %v376 = vand.u32 %v375, 4294901760
    %377 = vmatpush.msra.mxu0 %v376
    %v378 = vand.u32 %v47, 4294901760
    %v379 = vsub.f32 %v47, %v378
    %v380 = vand.u32 %v379, 4294901760
    %381 = vmatpush.msra.mxu0 %v380
    %v382 = vand.u32 %v45, 4294901760
    %383 = vmatmul.f32.gmra.mxu0 %v382
    %v384 = vpop.f32.mrf.mxu0
    %v385 = vadd.f32 %v316, %v384
    %386 = vdwg.mxu0
    %v387 = vand.u32 %v62, 4294901760
    %388 = vmatpush.msra.mxu0 %v387
    %v389 = vand.u32 %v61, 4294901760
    %390 = vmatpush.msra.mxu0 %v389
    %v391 = vand.u32 %v60, 4294901760
    %392 = vmatpush.msra.mxu0 %v391
    %v393 = vand.u32 %v59, 4294901760
    %394 = vmatpush.msra.mxu0 %v393
    %v395 = vand.u32 %v58, 4294901760
    %396 = vmatpush.msra.mxu0 %v395
    %v397 = vand.u32 %v57, 4294901760
    %398 = vmatpush.msra.mxu0 %v397
    %v399 = vand.u32 %v56, 4294901760
    %400 = vmatpush.msra.mxu0 %v399
    %v401 = vand.u32 %v55, 4294901760
    %402 = vmatpush.msra.mxu0 %v401
    %v403 = vand.u32 %v54, 4294901760
    %404 = vmatpush.msra.mxu0 %v403
    %v405 = vand.u32 %v53, 4294901760
    %406 = vmatpush.msra.mxu0 %v405
    %v407 = vand.u32 %v52, 4294901760
    %408 = vmatpush.msra.mxu0 %v407
    %v409 = vand.u32 %v51, 4294901760
    %410 = vmatpush.msra.mxu0 %v409
    %v411 = vand.u32 %v50, 4294901760
    %412 = vmatpush.msra.mxu0 %v411
    %v413 = vand.u32 %v49, 4294901760
    %414 = vmatpush.msra.mxu0 %v413
    %v415 = vand.u32 %v48, 4294901760
    %416 = vmatpush.msra.mxu0 %v415
    %v417 = vand.u32 %v47, 4294901760
    %418 = vmatpush.msra.mxu0 %v417
    %v419 = vand.u32 %v45, 4294901760
    %420 = vmatmul.f32.gmra.mxu0 %v419
    %v421 = vpop.f32.mrf.mxu0
    %v422 = vadd.f32 %v385, %v421
    %423 = vdwg.mxu0
    %v424 = vand.u32 %v78, 4294901760
    %425 = vmatpush.msra.mxu0 %v424
    %v426 = vand.u32 %v77, 4294901760
    %427 = vmatpush.msra.mxu0 %v426
    %v428 = vand.u32 %v76, 4294901760
    %429 = vmatpush.msra.mxu0 %v428
    %v430 = vand.u32 %v75, 4294901760
    %431 = vmatpush.msra.mxu0 %v430
    %v432 = vand.u32 %v74, 4294901760
    %433 = vmatpush.msra.mxu0 %v432
    %v434 = vand.u32 %v73, 4294901760
    %435 = vmatpush.msra.mxu0 %v434
    %v436 = vand.u32 %v72, 4294901760
    %437 = vmatpush.msra.mxu0 %v436
    %v438 = vand.u32 %v71, 4294901760
    %439 = vmatpush.msra.mxu0 %v438
    %v440 = vand.u32 %v70, 4294901760
    %441 = vmatpush.msra.mxu0 %v440
    %v442 = vand.u32 %v69, 4294901760
    %443 = vmatpush.msra.mxu0 %v442
    %v444 = vand.u32 %v68, 4294901760
    %445 = vmatpush.msra.mxu0 %v444
    %v446 = vand.u32 %v67, 4294901760
    %447 = vmatpush.msra.mxu0 %v446
    %v448 = vand.u32 %v66, 4294901760
    %449 = vmatpush.msra.mxu0 %v448
    %v450 = vand.u32 %v65, 4294901760
    %451 = vmatpush.msra.mxu0 %v450
    %v452 = vand.u32 %v64, 4294901760
    %453 = vmatpush.msra.mxu0 %v452
    %v454 = vand.u32 %v63, 4294901760
    %455 = vmatpush.msra.mxu0 %v454
    %v456 = vand.u32 %v46, 4294901760
    %v457 = vsub.f32 %v46, %v456
    %v458 = vand.u32 %v457, 4294901760
    %v459 = vsub.f32 %v457, %v458
    %v460 = vand.u32 %v459, 4294901760
    %461 = vmatmul.f32.gmra.mxu0 %v460
    %v462 = vpop.f32.mrf.mxu0
    %v463 = vadd.f32 %v422, %v462
    %464 = vdwg.mxu0
    %v465 = vand.u32 %v78, 4294901760
    %v466 = vsub.f32 %v78, %v465
    %v467 = vand.u32 %v466, 4294901760
    %v468 = vsub.f32 %v466, %v467
    %v469 = vand.u32 %v468, 4294901760
    %470 = vmatpush.msra.mxu0 %v469
    %v471 = vand.u32 %v77, 4294901760
    %v472 = vsub.f32 %v77, %v471
    %v473 = vand.u32 %v472, 4294901760
    %v474 = vsub.f32 %v472, %v473
    %v475 = vand.u32 %v474, 4294901760
    %476 = vmatpush.msra.mxu0 %v475
    %v477 = vand.u32 %v76, 4294901760
    %v478 = vsub.f32 %v76, %v477
    %v479 = vand.u32 %v478, 4294901760
    %v480 = vsub.f32 %v478, %v479
    %v481 = vand.u32 %v480, 4294901760
    %482 = vmatpush.msra.mxu0 %v481
    %v483 = vand.u32 %v75, 4294901760
    %v484 = vsub.f32 %v75, %v483
    %v485 = vand.u32 %v484, 4294901760
    %v486 = vsub.f32 %v484, %v485
    %v487 = vand.u32 %v486, 4294901760
    %488 = vmatpush.msra.mxu0 %v487
    %v489 = vand.u32 %v74, 4294901760
    %v490 = vsub.f32 %v74, %v489
    %v491 = vand.u32 %v490, 4294901760
    %v492 = vsub.f32 %v490, %v491
    %v493 = vand.u32 %v492, 4294901760
    %494 = vmatpush.msra.mxu0 %v493
    %v495 = vand.u32 %v73, 4294901760
    %v496 = vsub.f32 %v73, %v495
    %v497 = vand.u32 %v496, 4294901760
    %v498 = vsub.f32 %v496, %v497
    %v499 = vand.u32 %v498, 4294901760
    %500 = vmatpush.msra.mxu0 %v499
    %v501 = vand.u32 %v72, 4294901760
    %v502 = vsub.f32 %v72, %v501
    %v503 = vand.u32 %v502, 4294901760
    %v504 = vsub.f32 %v502, %v503
    %v505 = vand.u32 %v504, 4294901760
    %506 = vmatpush.msra.mxu0 %v505
    %v507 = vand.u32 %v71, 4294901760
    %v508 = vsub.f32 %v71, %v507
    %v509 = vand.u32 %v508, 4294901760
    %v510 = vsub.f32 %v508, %v509
    %v511 = vand.u32 %v510, 4294901760
    %512 = vmatpush.msra.mxu0 %v511
    %v513 = vand.u32 %v70, 4294901760
    %v514 = vsub.f32 %v70, %v513
    %v515 = vand.u32 %v514, 4294901760
    %v516 = vsub.f32 %v514, %v515
    %v517 = vand.u32 %v516, 4294901760
    %518 = vmatpush.msra.mxu0 %v517
    %v519 = vand.u32 %v69, 4294901760
    %v520 = vsub.f32 %v69, %v519
    %v521 = vand.u32 %v520, 4294901760
    %v522 = vsub.f32 %v520, %v521
    %v523 = vand.u32 %v522, 4294901760
    %524 = vmatpush.msra.mxu0 %v523
    %v525 = vand.u32 %v68, 4294901760
    %v526 = vsub.f32 %v68, %v525
    %v527 = vand.u32 %v526, 4294901760
    %v528 = vsub.f32 %v526, %v527
    %v529 = vand.u32 %v528, 4294901760
    %530 = vmatpush.msra.mxu0 %v529
    %v531 = vand.u32 %v67, 4294901760
    %v532 = vsub.f32 %v67, %v531
    %v533 = vand.u32 %v532, 4294901760
    %v534 = vsub.f32 %v532, %v533
    %v535 = vand.u32 %v534, 4294901760
    %536 = vmatpush.msra.mxu0 %v535
    %v537 = vand.u32 %v66, 4294901760
    %v538 = vsub.f32 %v66, %v537
    %v539 = vand.u32 %v538, 4294901760
    %v540 = vsub.f32 %v538, %v539
    %v541 = vand.u32 %v540, 4294901760
    %542 = vmatpush.msra.mxu0 %v541
    %v543 = vand.u32 %v65, 4294901760
    %v544 = vsub.f32 %v65, %v543
    %v545 = vand.u32 %v544, 4294901760
    %v546 = vsub.f32 %v544, %v545
    %v547 = vand.u32 %v546, 4294901760
    %548 = vmatpush.msra.mxu0 %v547
    %v549 = vand.u32 %v64, 4294901760
    %v550 = vsub.f32 %v64, %v549
    %v551 = vand.u32 %v550, 4294901760
    %v552 = vsub.f32 %v550, %v551
    %v553 = vand.u32 %v552, 4294901760
    %554 = vmatpush.msra.mxu0 %v553
    %v555 = vand.u32 %v63, 4294901760
    %v556 = vsub.f32 %v63, %v555
    %v557 = vand.u32 %v556, 4294901760
    %v558 = vsub.f32 %v556, %v557
    %v559 = vand.u32 %v558, 4294901760
    %560 = vmatpush.msra.mxu0 %v559
    %v561 = vand.u32 %v46, 4294901760
    %562 = vmatmul.f32.gmra.mxu0 %v561
    %v563 = vpop.f32.mrf.mxu0
    %v564 = vadd.f32 %v463, %v563
    %565 = vdwg.mxu0
    %v566 = vand.u32 %v78, 4294901760
    %v567 = vsub.f32 %v78, %v566
    %568 = vmatpush.msra.mxu0 %v567
    %v569 = vand.u32 %v77, 4294901760
    %v570 = vsub.f32 %v77, %v569
    %571 = vmatpush.msra.mxu0 %v570
    %v572 = vand.u32 %v76, 4294901760
    %v573 = vsub.f32 %v76, %v572
    %574 = vmatpush.msra.mxu0 %v573
    %v575 = vand.u32 %v75, 4294901760
    %v576 = vsub.f32 %v75, %v575
    %577 = vmatpush.msra.mxu0 %v576
    %v578 = vand.u32 %v74, 4294901760
    %v579 = vsub.f32 %v74, %v578
    %580 = vmatpush.msra.mxu0 %v579
    %v581 = vand.u32 %v73, 4294901760
    %v582 = vsub.f32 %v73, %v581
    %583 = vmatpush.msra.mxu0 %v582
    %v584 = vand.u32 %v72, 4294901760
    %v585 = vsub.f32 %v72, %v584
    %586 = vmatpush.msra.mxu0 %v585
    %v587 = vand.u32 %v71, 4294901760
    %v588 = vsub.f32 %v71, %v587
    %589 = vmatpush.msra.mxu0 %v588
    %v590 = vand.u32 %v70, 4294901760
    %v591 = vsub.f32 %v70, %v590
    %592 = vmatpush.msra.mxu0 %v591
    %v593 = vand.u32 %v69, 4294901760
    %v594 = vsub.f32 %v69, %v593
    %595 = vmatpush.msra.mxu0 %v594
    %v596 = vand.u32 %v68, 4294901760
    %v597 = vsub.f32 %v68, %v596
    %598 = vmatpush.msra.mxu0 %v597
    %v599 = vand.u32 %v67, 4294901760
    %v600 = vsub.f32 %v67, %v599
    %601 = vmatpush.msra.mxu0 %v600
    %v602 = vand.u32 %v66, 4294901760
    %v603 = vsub.f32 %v66, %v602
    %604 = vmatpush.msra.mxu0 %v603
    %v605 = vand.u32 %v65, 4294901760
    %v606 = vsub.f32 %v65, %v605
    %607 = vmatpush.msra.mxu0 %v606
    %v608 = vand.u32 %v64, 4294901760
    %v609 = vsub.f32 %v64, %v608
    %610 = vmatpush.msra.mxu0 %v609
    %v611 = vand.u32 %v63, 4294901760
    %v612 = vsub.f32 %v63, %v611
    %613 = vmatpush.msra.mxu0 %v612
    %v614 = vand.u32 %v46, 4294901760
    %v615 = vsub.f32 %v46, %v614
    %616 = vmatmul.f32.gmra.mxu0 %v615
    %v617 = vpop.f32.mrf.mxu0
    %v618 = vadd.f32 %v564, %v617
    %619 = vdwg.mxu0
    %v620 = vand.u32 %v78, 4294901760
    %621 = vmatpush.msra.mxu0 %v620
    %v622 = vand.u32 %v77, 4294901760
    %623 = vmatpush.msra.mxu0 %v622
    %v624 = vand.u32 %v76, 4294901760
    %625 = vmatpush.msra.mxu0 %v624
    %v626 = vand.u32 %v75, 4294901760
    %627 = vmatpush.msra.mxu0 %v626
    %v628 = vand.u32 %v74, 4294901760
    %629 = vmatpush.msra.mxu0 %v628
    %v630 = vand.u32 %v73, 4294901760
    %631 = vmatpush.msra.mxu0 %v630
    %v632 = vand.u32 %v72, 4294901760
    %633 = vmatpush.msra.mxu0 %v632
    %v634 = vand.u32 %v71, 4294901760
    %635 = vmatpush.msra.mxu0 %v634
    %v636 = vand.u32 %v70, 4294901760
    %637 = vmatpush.msra.mxu0 %v636
    %v638 = vand.u32 %v69, 4294901760
    %639 = vmatpush.msra.mxu0 %v638
    %v640 = vand.u32 %v68, 4294901760
    %641 = vmatpush.msra.mxu0 %v640
    %v642 = vand.u32 %v67, 4294901760
    %643 = vmatpush.msra.mxu0 %v642
    %v644 = vand.u32 %v66, 4294901760
    %645 = vmatpush.msra.mxu0 %v644
    %v646 = vand.u32 %v65, 4294901760
    %647 = vmatpush.msra.mxu0 %v646
    %v648 = vand.u32 %v64, 4294901760
    %649 = vmatpush.msra.mxu0 %v648
    %v650 = vand.u32 %v63, 4294901760
    %651 = vmatpush.msra.mxu0 %v650
    %v652 = vand.u32 %v46, 4294901760
    %v653 = vsub.f32 %v46, %v652
    %v654 = vand.u32 %v653, 4294901760
    %655 = vmatmul.f32.gmra.mxu0 %v654
    %v656 = vpop.f32.mrf.mxu0
    %v657 = vadd.f32 %v618, %v656
    %658 = vdwg.mxu0
    %v659 = vand.u32 %v78, 4294901760
    %v660 = vsub.f32 %v78, %v659
    %v661 = vand.u32 %v660, 4294901760
    %662 = vmatpush.msra.mxu0 %v661
    %v663 = vand.u32 %v77, 4294901760
    %v664 = vsub.f32 %v77, %v663
    %v665 = vand.u32 %v664, 4294901760
    %666 = vmatpush.msra.mxu0 %v665
    %v667 = vand.u32 %v76, 4294901760
    %v668 = vsub.f32 %v76, %v667
    %v669 = vand.u32 %v668, 4294901760
    %670 = vmatpush.msra.mxu0 %v669
    %v671 = vand.u32 %v75, 4294901760
    %v672 = vsub.f32 %v75, %v671
    %v673 = vand.u32 %v672, 4294901760
    %674 = vmatpush.msra.mxu0 %v673
    %v675 = vand.u32 %v74, 4294901760
    %v676 = vsub.f32 %v74, %v675
    %v677 = vand.u32 %v676, 4294901760
    %678 = vmatpush.msra.mxu0 %v677
    %v679 = vand.u32 %v73, 4294901760
    %v680 = vsub.f32 %v73, %v679
    %v681 = vand.u32 %v680, 4294901760
    %682 = vmatpush.msra.mxu0 %v681
    %v683 = vand.u32 %v72, 4294901760
    %v684 = vsub.f32 %v72, %v683
    %v685 = vand.u32 %v684, 4294901760
    %686 = vmatpush.msra.mxu0 %v685
    %v687 = vand.u32 %v71, 4294901760
    %v688 = vsub.f32 %v71, %v687
    %v689 = vand.u32 %v688, 4294901760
    %690 = vmatpush.msra.mxu0 %v689
    %v691 = vand.u32 %v70, 4294901760
    %v692 = vsub.f32 %v70, %v691
    %v693 = vand.u32 %v692, 4294901760
    %694 = vmatpush.msra.mxu0 %v693
    %v695 = vand.u32 %v69, 4294901760
    %v696 = vsub.f32 %v69, %v695
    %v697 = vand.u32 %v696, 4294901760
    %698 = vmatpush.msra.mxu0 %v697
    %v699 = vand.u32 %v68, 4294901760
    %v700 = vsub.f32 %v68, %v699
    %v701 = vand.u32 %v700, 4294901760
    %702 = vmatpush.msra.mxu0 %v701
    %v703 = vand.u32 %v67, 4294901760
    %v704 = vsub.f32 %v67, %v703
    %v705 = vand.u32 %v704, 4294901760
    %706 = vmatpush.msra.mxu0 %v705
    %v707 = vand.u32 %v66, 4294901760
    %v708 = vsub.f32 %v66, %v707
    %v709 = vand.u32 %v708, 4294901760
    %710 = vmatpush.msra.mxu0 %v709
    %v711 = vand.u32 %v65, 4294901760
    %v712 = vsub.f32 %v65, %v711
    %v713 = vand.u32 %v712, 4294901760
    %714 = vmatpush.msra.mxu0 %v713
    %v715 = vand.u32 %v64, 4294901760
    %v716 = vsub.f32 %v64, %v715
    %v717 = vand.u32 %v716, 4294901760
    %718 = vmatpush.msra.mxu0 %v717
    %v719 = vand.u32 %v63, 4294901760
    %v720 = vsub.f32 %v63, %v719
    %v721 = vand.u32 %v720, 4294901760
    %722 = vmatpush.msra.mxu0 %v721
    %v723 = vand.u32 %v46, 4294901760
    %724 = vmatmul.f32.gmra.mxu0 %v723
    %v725 = vpop.f32.mrf.mxu0
    %v726 = vadd.f32 %v657, %v725
    %727 = vdwg.mxu0
    %v728 = vand.u32 %v78, 4294901760
    %729 = vmatpush.msra.mxu0 %v728
    %v730 = vand.u32 %v77, 4294901760
    %731 = vmatpush.msra.mxu0 %v730
    %v732 = vand.u32 %v76, 4294901760
    %733 = vmatpush.msra.mxu0 %v732
    %v734 = vand.u32 %v75, 4294901760
    %735 = vmatpush.msra.mxu0 %v734
    %v736 = vand.u32 %v74, 4294901760
    %737 = vmatpush.msra.mxu0 %v736
    %v738 = vand.u32 %v73, 4294901760
    %739 = vmatpush.msra.mxu0 %v738
    %v740 = vand.u32 %v72, 4294901760
    %741 = vmatpush.msra.mxu0 %v740
    %v742 = vand.u32 %v71, 4294901760
    %743 = vmatpush.msra.mxu0 %v742
    %v744 = vand.u32 %v70, 4294901760
    %745 = vmatpush.msra.mxu0 %v744
    %v746 = vand.u32 %v69, 4294901760
    %747 = vmatpush.msra.mxu0 %v746
    %v748 = vand.u32 %v68, 4294901760
    %749 = vmatpush.msra.mxu0 %v748
    %v750 = vand.u32 %v67, 4294901760
    %751 = vmatpush.msra.mxu0 %v750
    %v752 = vand.u32 %v66, 4294901760
    %753 = vmatpush.msra.mxu0 %v752
    %v754 = vand.u32 %v65, 4294901760
    %755 = vmatpush.msra.mxu0 %v754
    %v756 = vand.u32 %v64, 4294901760
    %757 = vmatpush.msra.mxu0 %v756
    %v758 = vand.u32 %v63, 4294901760
    %759 = vmatpush.msra.mxu0 %v758
    %v760 = vand.u32 %v46, 4294901760
    %761 = vmatmul.f32.gmra.mxu0 %v760
    %v762 = vpop.f32.mrf.mxu0
    %v763 = vadd.f32 %v726, %v762
    %764 = vdwg.mxu0
    %765 = vst [vmem:[#allocation7] sm:$0xff] %v763
    // Predicated region
    $region22: #{tpu_custom_call.1} parent=1 // pred_check
      _
    $region23: #{tpu_custom_call.1} parent=1 // pred_check_branch
      %767 = sbr.rel (0) target = $region25
    $region24: #{tpu_custom_call.1} parent=1 // pred_region
      %769 = vsyncadd [#allocation4], 0
      %s771 = sshll.u32 [#allocation7], 4
      %s772 = int_to_ptr.vmem [resolvable:$true] %s771
      %s773 = sshll.u32 %s3, 4
      %s774 = int_to_ptr.hbm [resolvable:$true] %s773
      %776 = dma.vmem_to_hbm [thread:$0]  %s772, 128, %s774, [#allocation4]
    $region25: #{tpu_custom_call.1} parent=1 // pred_fallthru
      _
    // Predicated region
    $region26: #{tpu_custom_call.1} parent=1 // pred_check
      _
    $region27: #{tpu_custom_call.1} parent=1 // pred_check_branch
      %778 = sbr.rel (0) target = $region29
    $region28: #{tpu_custom_call.1} parent=1 // pred_region
      %780 = dma.done [#allocation4], 128
    $region29: #{tpu_custom_call.1} parent=1 // pred_fallthru
      _
    %781 = vsyncpa [#allocation3], 1
    %782 = vsyncpa [#allocation6], 1
    %783 = vsyncpa [#allocation4], 1

</llo_original>
